<compile_context>
chip_gen: v6e
topology: v6e:2x2x1
jax: 0.10.0
libtpu: 0.0.40
codegen_flags: <defaults>
</compile_context>

<pallas_src>
import jax
import jax.numpy as jnp
from jax.experimental import pallas as pl
from jax.experimental.pallas import tpu as pltpu


# ---------------------------------------------------------------------------
# Primary path: whole-array HBM -> HBM DMA identity (no VMEM round-trip).
# ---------------------------------------------------------------------------
def _identity_dma_kernel(x_hbm_ref, o_hbm_ref, copy_sem):
    copy = pltpu.make_async_copy(x_hbm_ref, o_hbm_ref, copy_sem)
    copy.start()
    copy.wait()


def base_backbone_forward(x: jax.Array) -> jax.Array:
    """Identity forward pass of BaseBackbone (abstract stub) via direct DMA."""
    nbytes = int(x.size) * jnp.dtype(x.dtype).itemsize
    return pl.pallas_call(
        _identity_dma_kernel,
        out_shape=jax.ShapeDtypeStruct(x.shape, x.dtype),
        in_specs=[pl.BlockSpec(memory_space=pl.ANY)],
        out_specs=pl.BlockSpec(memory_space=pl.ANY),
        scratch_shapes=[pltpu.SemaphoreType.DMA],
        cost_estimate=pl.CostEstimate(
            flops=0, transcendentals=0, bytes_accessed=2 * nbytes
        ),
    )(x)


# ---------------------------------------------------------------------------
# Secondary path: tuned tiled copy — the template a concrete backbone's
# per-tile compute would slot into (kernel body = where real work goes).
# ---------------------------------------------------------------------------
def _identity_tile_kernel(x_ref, o_ref):
    o_ref[...] = x_ref[...]


_LANE_CANDIDATES = (2048, 1024, 512, 256, 128)
# ~2 MiB per tile: with double-buffered in + out (~4x tile) this stays under
# v5e's 16 MiB scoped-VMEM default and leaves ample headroom on v6e/v7x.
_TARGET_TILE_BYTES = 2 * 1024 * 1024


def base_backbone_forward_tiled(x: jax.Array) -> jax.Array:
    """Identity forward via a lane-dense, large-tile VMEM-pipelined copy."""
    total = int(x.size)
    itemsize = jnp.dtype(x.dtype).itemsize

    # Lane-dense flattening: (rows, L) with L a large multiple of 128 that
    # divides the element count exactly -> no pad / slice HBM passes.
    lanes = next((l for l in _LANE_CANDIDATES if total % l == 0), None)
    if lanes is None:
        # Element count not a multiple of 128: no pad-free lane-dense tiling
        # exists; the direct-DMA identity already moves the minimum bytes.
        return base_backbone_forward(x)

    rows = total // lanes
    x2d = x.reshape(rows, lanes)

    # dtype-aware sublane tile: 8 rows (f32), 16 (bf16/f16), 32 (int8/fp8).
    sublane = max(8, 32 // itemsize)
    block_rows = max(
        sublane, (_TARGET_TILE_BYTES // (lanes * itemsize)) // sublane * sublane
    )
    if rows <= block_rows:
        block_rows = rows  # single block; block == full dim satisfies (8,128)
    # cdiv grid: a ragged last tile is handled by Pallas (OOB writes dropped),
    # so no trailing rows are ever silently skipped.
    grid = (pl.cdiv(rows, block_rows),)

    out2d = pl.pallas_call(
        _identity_tile_kernel,
        out_shape=jax.ShapeDtypeStruct((rows, lanes), x.dtype),
        grid_spec=pltpu.PrefetchScalarGridSpec(
            num_scalar_prefetch=0,
            grid=grid,
            in_specs=[pl.BlockSpec((block_rows, lanes), lambda i: (i, 0))],
            out_specs=pl.BlockSpec((block_rows, lanes), lambda i: (i, 0)),
        ),
        compiler_params=pltpu.CompilerParams(
            dimension_semantics=("parallel",)  # lets v7x shard tiles over 2 TCs
        ),
        cost_estimate=pl.CostEstimate(
            flops=0, transcendentals=0, bytes_accessed=2 * total * itemsize
        ),
    )(x2d)
    return out2d.reshape(x.shape)


if __name__ == "__main__":
    key = jax.random.PRNGKey(0)
    # Small NCHW batch consistent with a conv backbone input.
    x = jax.random.normal(key, (2, 4, 16, 16), dtype=jnp.float32)

    y = base_backbone_forward(x)
    jax.block_until_ready(y)
    assert y.shape == x.shape and y.dtype == x.dtype
    assert bool(jnp.array_equal(y, x))

    y2 = base_backbone_forward_tiled(x)
    jax.block_until_ready(y2)
    assert y2.shape == x.shape and y2.dtype == x.dtype
    assert bool(jnp.array_equal(y2, x))

    print("KERNEL_OK")
</pallas_src>

<mosaic_0001>
module attributes {stable_mosaic.version = 11 : i64} {
  func.func @_identity_dma_kernel(%arg0: memref<2x4x16x16xf32, #tpu.memory_space<any>>, %arg1: memref<2x4x16x16xf32, #tpu.memory_space<any>>, %arg2: memref<!tpu.dma_semaphore, #tpu.memory_space<semaphore_mem>>) attributes {dimension_semantics = [], scalar_prefetch = 0 : i64, scratch_operands = 1 : i64, tpu.core_type = #tpu.core_type<tc>} {
    tpu.enqueue_dma source(%arg0 : memref<2x4x16x16xf32, #tpu.memory_space<any>>) target(%arg1 : memref<2x4x16x16xf32, #tpu.memory_space<any>>) target_semaphore(%arg2 : memref<!tpu.dma_semaphore, #tpu.memory_space<semaphore_mem>>)
    tpu.wait_dma2 semaphore(%arg2 : memref<!tpu.dma_semaphore, #tpu.memory_space<semaphore_mem>>) src(%arg0 : memref<2x4x16x16xf32, #tpu.memory_space<any>>) dst(%arg1 : memref<2x4x16x16xf32, #tpu.memory_space<any>>)
    return
  }
}

</mosaic_0001>

<llo_original>
// kernel: tpu_custom_call.1
$region0: #{tpu_custom_call.1}
  #allocation0 [shape = 'u32[]', space=smem, size = 0x4, offset = 0x4, fixed_abs, tag = 'smem constant byte address 0x4 - core index']
  #allocation1 [shape = 'u32[144,128]{1,0:T(1,128)}', space=vmem, size = 0x12000, scoped, tag = 'internal scratch']
  #allocation2 [shape = 's32[1]{0}', space=sflag, size = 0x4, scoped, tag = 'scratch operand']
  #allocation3 [shape = 's32[]', space=sflag, size = 0x4, offset = 0, fixed_abs, tag = 'sflag constant byte address 0x0 - dummy sync flag']
  #allocation4 [shape = 'u32[0]{0}', space=smem, size = 0, offset = 0, fixed_abs, tag = 'smem constant byte address 0x0 - null']
  %s0 = inlined_call_operand.hbm [shape: f32[2,4,16,16], index: 0, kind: input, shape index: {}]
  %s1 = inlined_call_operand.hbm [shape: f32[2,4,16,16], index: 1, kind: output, shape index: {}]
  %s2 = sld [smem:[#allocation0]]
  $region2: #{tpu_custom_call.1} parent=0
    _
  %s4 = ssub.s32 1, %s2
  %s5 = scalar_select 0, %s4, %s2
  %s7 = sshll.u32 1, 14
  %s8 = sxor.u32 4294967295, %s7
  %12 = dma.general %s0, 2048, %s1, [#allocation2], 131072, [#allocation4], 0, 0
  %s13 = smul.u32 2, 4
  %s14 = smul.u32 %s13, 16
  %s15 = smul.u32 %s14, 1
  %s16 = sshll.u32 %s15, 4
  %17 = dma.done [#allocation2], %s16
  %18 = vsyncmov [#allocation2]
  %s19 = vpop.sfrf %18
  %p20 = scmp.eq.s32.totalorder %s19, 0
  %p21 = pneg %p20
  %23 = shalt.err (%p21)

</llo_original>
